<compile_context>
chip_gen: v5e
topology: v5e:2x2
jax: 0.10.0
libtpu: 0.0.40
codegen_flags: <defaults>
</compile_context>

<pallas_src>
import jax
import jax.numpy as jnp
from jax.experimental import pallas as pl
from jax.experimental.pallas import tpu as pltpu


def _mlp_block_kernel(x_ref, w1_ref, b1_ref, w2_ref, b2_ref, out_ref):
    # x_ref:   (B, D_in)          shared batch (weight dtype), resident across steps
    # w1_ref:  (D_in, N_BLK*H)    this step's nets, fused along lanes (bf16)
    # b1_ref:  (1, N_BLK*H)       f32
    # w2_ref:  (N_BLK, H, C)      bf16
    # b2_ref:  (N_BLK, 1, C)      f32
    # out_ref: (N_BLK, B, C)      f32
    n_blk, hidden, _ = w2_ref.shape

    # Layer 1: one wide MXU matmul covering all N_BLK nets at once (f32 accum).
    h = jnp.dot(x_ref[...], w1_ref[...], preferred_element_type=jnp.float32)
    h = jnp.maximum(h + b1_ref[...], 0.0)            # (B, N_BLK*H) f32
    h = h.astype(w2_ref.dtype)

    # Layer 2: per-net tiny matmuls (negligible FLOPs/bytes). H is lane-tile
    # aligned (guarded wrapper-side), so each slice is a free static vreg select.
    for n in range(n_blk):
        h_n = h[:, n * hidden:(n + 1) * hidden]      # (B, H)
        y_n = jnp.dot(h_n, w2_ref[n], preferred_element_type=jnp.float32)
        out_ref[n] = (y_n + b2_ref[n]).astype(out_ref.dtype)


def prepare_multiple_models_params(w1, b1, w2, b2, *,
                                    max_block_bytes=12 * 1024 * 1024,
                                    weight_dtype=jnp.bfloat16,
                                    min_grid_blocks=2):
    """One-time re-layout of parameters into the weight-streaming layout.

    Call once and reuse: the forward then contains no transpose/pad/cast pass
    over the weights (the Pallas kernel is the only HBM read of them).

    w1: (n_nets, D_in, H)   b1: (n_nets, H)
    w2: (n_nets, H, C)      b2: (n_nets, C)
    """
    n_nets, d_in, hidden = w1.shape
    n_classes = w2.shape[-1]
    wbytes = jnp.dtype(weight_dtype).itemsize

    # Nets per grid step: keep the (double-buffered) w1 block inside scoped VMEM,
    # and keep at least `min_grid_blocks` grid steps so the independent nets axis
    # can be sharded across both TensorCores on v7x.
    bytes_per_net = d_in * hidden * wbytes
    n_blk = int(max(1, min(n_nets, max_block_bytes // bytes_per_net)))
    if n_nets >= min_grid_blocks:
        n_blk = min(n_blk, pl.cdiv(n_nets, min_grid_blocks))
    n_blocks = pl.cdiv(n_nets, n_blk)

    # Lane/sublane divisibility guard for multi-block tiling; otherwise fall back
    # to one full-extent block (exempt from the (8,128) divisibility rule).
    if n_blocks > 1 and ((n_blk * hidden) % 128 != 0 or d_in % 8 != 0):
        n_blk, n_blocks = n_nets, 1
    n_pad = n_blocks * n_blk

    # Fused layouts: column block [n*H:(n+1)*H] of w1t == w1[n]. Weights in bf16
    # (halves streamed bytes; MXU consumes bf16 with f32 accumulation), biases f32.
    w1t = jnp.transpose(w1, (1, 0, 2)).reshape(d_in, n_nets * hidden).astype(weight_dtype)
    b1f = b1.reshape(1, n_nets * hidden).astype(jnp.float32)
    w2r = w2.astype(weight_dtype)
    b2r = b2.reshape(n_nets, 1, n_classes).astype(jnp.float32)

    if n_pad != n_nets:
        extra = n_pad - n_nets
        w1t = jnp.pad(w1t, ((0, 0), (0, extra * hidden)))
        b1f = jnp.pad(b1f, ((0, 0), (0, extra * hidden)))
        w2r = jnp.pad(w2r, ((0, extra), (0, 0), (0, 0)))
        b2r = jnp.pad(b2r, ((0, extra), (0, 0), (0, 0)))

    # NOTE(v7x sweep): add `pipeline_mode=pl.Buffered(3)` on the w1 BlockSpec in
    # the forward if per-step DMA prologue gaps show up after block resizing.
    return dict(w1t=w1t, b1f=b1f, w2r=w2r, b2r=b2r,
                n_nets=n_nets, n_pad=n_pad, n_blk=n_blk, n_blocks=n_blocks,
                d_in=d_in, hidden=hidden, n_classes=n_classes,
                weight_dtype=weight_dtype)


def multiple_models_forward_stacked_prepared(x_nchw, p):
    """Stacked forward with pre-fused params: returns (n_nets, B, n_classes)."""
    B = x_nchw.shape[0]
    x = x_nchw.reshape(B, -1).astype(p["weight_dtype"])
    assert x.shape[1] == p["d_in"], "input feature size mismatch with prepared params"

    n_blk, n_blocks, n_pad = p["n_blk"], p["n_blocks"], p["n_pad"]
    d_in, hidden, n_classes = p["d_in"], p["hidden"], p["n_classes"]

    out = pl.pallas_call(
        _mlp_block_kernel,
        out_shape=jax.ShapeDtypeStruct((n_pad, B, n_classes), jnp.float32),
        grid_spec=pltpu.PrefetchScalarGridSpec(
            num_scalar_prefetch=0,
            grid=(n_blocks,),
            in_specs=[
                # batch: constant block index -> stays resident, no re-DMA
                pl.BlockSpec((B, d_in), lambda i: (0, 0)),
                # fused first-layer weights: big lane-contiguous bf16 block per step
                pl.BlockSpec((d_in, n_blk * hidden), lambda i: (0, i)),
                pl.BlockSpec((1, n_blk * hidden), lambda i: (0, i)),
                pl.BlockSpec((n_blk, hidden, n_classes), lambda i: (i, 0, 0)),
                pl.BlockSpec((n_blk, 1, n_classes), lambda i: (i, 0, 0)),
            ],
            out_specs=pl.BlockSpec((n_blk, B, n_classes), lambda i: (i, 0, 0)),
        ),
        compiler_params=pltpu.CompilerParams(
            # nets axis is fully independent -> shardable across TCs on v7x
            dimension_semantics=("parallel",),
            # large blocks need headroom above the default scoped-VMEM limit;
            # 48 MiB is safe on v5e/v6e (128 MiB phys) and v7x (64 MiB phys).
            vmem_limit_bytes=48 * 1024 * 1024,
        ),
    )(x, p["w1t"], p["b1f"], p["w2r"], p["b2r"])

    return out[:p["n_nets"]]


def multiple_models_forward_stacked(x_nchw, w1, b1, w2, b2, **prep_kw):
    """Convenience one-shot API (prepares layout on every call — prefer
    prepare_multiple_models_params + *_prepared for repeated calls)."""
    p = prepare_multiple_models_params(w1, b1, w2, b2, **prep_kw)
    return multiple_models_forward_stacked_prepared(x_nchw, p)


def multiple_models_forward(x_nchw, w1, b1, w2, b2, **prep_kw):
    """nn.Module-parity API: list of per-net outputs (single kernel launch)."""
    out = multiple_models_forward_stacked(x_nchw, w1, b1, w2, b2, **prep_kw)
    return list(out)


def _reference_forward(x_nchw, w1, b1, w2, b2):
    B = x_nchw.shape[0]
    x = x_nchw.reshape(B, -1).astype(jnp.float32)
    outs = []
    for i in range(w1.shape[0]):
        h = jnp.maximum(x @ w1[i] + b1[i], 0.0)
        outs.append(h @ w2[i] + b2[i])
    return outs


def _make_params(key, n_nets, d_in, hidden, n_classes):
    k1, k2, k3, k4 = jax.random.split(key, 4)
    w1 = jax.random.normal(k1, (n_nets, d_in, hidden), jnp.float32) * (1.0 / d_in ** 0.5)
    b1 = jax.random.normal(k2, (n_nets, hidden), jnp.float32) * 0.01
    w2 = jax.random.normal(k3, (n_nets, hidden, n_classes), jnp.float32) * (1.0 / hidden ** 0.5)
    b2 = jax.random.normal(k4, (n_nets, n_classes), jnp.float32) * 0.01
    return w1, b1, w2, b2


if __name__ == "__main__":
    B, C, H, W = 2, 4, 16, 16
    d_in = C * H * W          # 1024
    hidden = 128
    n_classes = 10

    key = jax.random.PRNGKey(0)
    kx, kp, kp2 = jax.random.split(key, 3)
    x = jax.random.normal(kx, (B, C, H, W), dtype=jnp.float32)

    # bf16 weight streaming -> loosened tolerances vs. the f32 reference.
    ATOL = RTOL = 3e-2

    # --- Case 1: n_nets=3. Prepare ONCE, run the forward twice (layout prep is
    # out of the per-call path); even-grid cap gives 2 grid steps of 2 nets. ---
    n_nets = 3
    w1, b1, w2, b2 = _make_params(kp, n_nets, d_in, hidden, n_classes)
    prepared = prepare_multiple_models_params(w1, b1, w2, b2)
    out = jax.block_until_ready(multiple_models_forward_stacked_prepared(x, prepared))
    out_again = jax.block_until_ready(multiple_models_forward_stacked_prepared(x, prepared))
    refs = _reference_forward(x, w1, b1, w2, b2)
    assert out.shape == (n_nets, B, n_classes)
    for i in range(n_nets):
        assert jnp.allclose(out[i], refs[i], atol=ATOL, rtol=RTOL), "mismatch (case 1)"
        assert jnp.allclose(out_again[i], out[i]), "non-deterministic repeat (case 1)"

    # --- Case 2: n_nets=5 with a forced small block to exercise the
    # multi-step + zero-padding path of the same kernel, via the list API. ---
    n_nets2 = 5
    w1b, b1b, w2b, b2b = _make_params(kp2, n_nets2, d_in, hidden, n_classes)
    outs2 = multiple_models_forward(x, w1b, b1b, w2b, b2b,
                                    max_block_bytes=1024 * 1024)
    outs2 = [jax.block_until_ready(o) for o in outs2]
    refs2 = _reference_forward(x, w1b, b1b, w2b, b2b)
    assert len(outs2) == n_nets2 and outs2[0].shape == (B, n_classes)
    for i in range(n_nets2):
        assert jnp.allclose(outs2[i], refs2[i], atol=ATOL, rtol=RTOL), "mismatch (case 2)"

    # TODO(synk): apply_noise (training-time gradient perturbation) has no
    # forward-pass Pallas equivalent; not implemented.
    print("KERNEL_OK")
</pallas_src>

<mosaic_0001>
module attributes {stable_mosaic.version = 11 : i64} {
  func.func @_mlp_block_kernel(%arg0: i32, %arg1: memref<2x1024xbf16, #tpu.memory_space<vmem>>, %arg2: memref<1024x256xbf16, #tpu.memory_space<vmem>>, %arg3: memref<1x256xf32, #tpu.memory_space<vmem>>, %arg4: memref<2x128x10xbf16, #tpu.memory_space<vmem>>, %arg5: memref<2x1x10xf32, #tpu.memory_space<vmem>>, %arg6: memref<2x2x10xf32, #tpu.memory_space<vmem>>) attributes {dimension_semantics = [#tpu.dimension_semantics<parallel>], iteration_bounds = array<i64: 2>, scalar_prefetch = 0 : i64, scratch_operands = 0 : i64, tpu.core_type = #tpu.core_type<tc>, window_params = [{pipeline_mode = #tpu.pipeline_mode<synchronous>, transform_indices = @transform_0, window_bounds = array<i64: 2, 1024>}, {transform_indices = @transform_1, window_bounds = array<i64: 1024, 256>}, {transform_indices = @transform_2, window_bounds = array<i64: 1, 256>}, {transform_indices = @transform_3, window_bounds = array<i64: 2, 128, 10>}, {transform_indices = @transform_4, window_bounds = array<i64: 2, 1, 10>}, {transform_indices = @transform_5, window_bounds = array<i64: 2, 2, 10>}]} {
    %c0 = arith.constant 0 : index
    %c0_0 = arith.constant 0 : index
    %0 = vector.load %arg1[%c0, %c0_0] : memref<2x1024xbf16, #tpu.memory_space<vmem>>, vector<2x1024xbf16>
    %c0_1 = arith.constant 0 : index
    %c0_2 = arith.constant 0 : index
    %1 = vector.load %arg2[%c0_1, %c0_2] : memref<1024x256xbf16, #tpu.memory_space<vmem>>, vector<1024x256xbf16>
    %cst = arith.constant dense<0.000000e+00> : vector<2x256xf32>
    %2 = tpu.matmul %0, %1, %cst {dimension_numbers = #tpu.dot_dimension_numbers<[1], [0], [0], [1], [0, 0, 1, 1], [], []>} : vector<2x1024xbf16>, vector<1024x256xbf16>, vector<2x256xf32> -> vector<2x256xf32>
    %c0_3 = arith.constant 0 : index
    %c0_4 = arith.constant 0 : index
    %3 = vector.load %arg3[%c0_3, %c0_4] : memref<1x256xf32, #tpu.memory_space<vmem>>, vector<1x256xf32>
    %4 = vector.broadcast %3 : vector<1x256xf32> to vector<2x256xf32>
    %5 = arith.addf %2, %4 : vector<2x256xf32>
    %cst_5 = arith.constant 0.000000e+00 : f32
    %6 = vector.broadcast %cst_5 : f32 to vector<2x256xf32>
    %7 = arith.maximumf %5, %6 : vector<2x256xf32>
    %8 = arith.truncf %7 : vector<2x256xf32> to vector<2x256xbf16>
    %9 = vector.extract_strided_slice %8 {offsets = [0, 0], sizes = [2, 128], strides = [1, 1]} : vector<2x256xbf16> to vector<2x128xbf16>
    %c0_6 = arith.constant 0 : index
    %c0_7 = arith.constant 0 : index
    %c0_8 = arith.constant 0 : index
    %10 = vector.load %arg4[%c0_6, %c0_7, %c0_8] : memref<2x128x10xbf16, #tpu.memory_space<vmem>>, vector<1x128x10xbf16>
    %11 = vector.shape_cast %10 : vector<1x128x10xbf16> to vector<128x10xbf16>
    %cst_9 = arith.constant dense<0.000000e+00> : vector<2x10xf32>
    %12 = tpu.matmul %9, %11, %cst_9 {dimension_numbers = #tpu.dot_dimension_numbers<[1], [0], [0], [1], [0, 0, 1, 1], [], []>} : vector<2x128xbf16>, vector<128x10xbf16>, vector<2x10xf32> -> vector<2x10xf32>
    %c0_10 = arith.constant 0 : index
    %c0_11 = arith.constant 0 : index
    %c0_12 = arith.constant 0 : index
    %13 = vector.load %arg5[%c0_10, %c0_11, %c0_12] : memref<2x1x10xf32, #tpu.memory_space<vmem>>, vector<1x1x10xf32>
    %14 = vector.shape_cast %13 : vector<1x1x10xf32> to vector<1x10xf32>
    %15 = vector.broadcast %14 : vector<1x10xf32> to vector<2x10xf32>
    %16 = arith.addf %12, %15 : vector<2x10xf32>
    %c0_13 = arith.constant 0 : index
    %c0_14 = arith.constant 0 : index
    %c0_15 = arith.constant 0 : index
    %17 = vector.load %arg6[%c0_13, %c0_14, %c0_15] : memref<2x2x10xf32, #tpu.memory_space<vmem>>, vector<1x2x10xf32>
    %18 = vector.shape_cast %17 : vector<1x2x10xf32> to vector<2x10xf32>
    %19 = vector.shape_cast %16 : vector<2x10xf32> to vector<1x2x10xf32>
    tpu.vector_store %arg6[%c0_13, %c0_14, %c0_15], %19 {strides = array<i32>} : memref<2x2x10xf32, #tpu.memory_space<vmem>>, vector<1x2x10xf32>,
    %20 = vector.extract_strided_slice %8 {offsets = [0, 128], sizes = [2, 128], strides = [1, 1]} : vector<2x256xbf16> to vector<2x128xbf16>
    %c1 = arith.constant 1 : index
    %c0_16 = arith.constant 0 : index
    %c0_17 = arith.constant 0 : index
    %21 = vector.load %arg4[%c1, %c0_16, %c0_17] : memref<2x128x10xbf16, #tpu.memory_space<vmem>>, vector<1x128x10xbf16>
    %22 = vector.shape_cast %21 : vector<1x128x10xbf16> to vector<128x10xbf16>
    %cst_18 = arith.constant dense<0.000000e+00> : vector<2x10xf32>
    %23 = tpu.matmul %20, %22, %cst_18 {dimension_numbers = #tpu.dot_dimension_numbers<[1], [0], [0], [1], [0, 0, 1, 1], [], []>} : vector<2x128xbf16>, vector<128x10xbf16>, vector<2x10xf32> -> vector<2x10xf32>
    %c1_19 = arith.constant 1 : index
    %c0_20 = arith.constant 0 : index
    %c0_21 = arith.constant 0 : index
    %24 = vector.load %arg5[%c1_19, %c0_20, %c0_21] : memref<2x1x10xf32, #tpu.memory_space<vmem>>, vector<1x1x10xf32>
    %25 = vector.shape_cast %24 : vector<1x1x10xf32> to vector<1x10xf32>
    %26 = vector.broadcast %25 : vector<1x10xf32> to vector<2x10xf32>
    %27 = arith.addf %23, %26 : vector<2x10xf32>
    %c1_22 = arith.constant 1 : index
    %c0_23 = arith.constant 0 : index
    %c0_24 = arith.constant 0 : index
    %28 = vector.load %arg6[%c1_22, %c0_23, %c0_24] : memref<2x2x10xf32, #tpu.memory_space<vmem>>, vector<1x2x10xf32>
    %29 = vector.shape_cast %28 : vector<1x2x10xf32> to vector<2x10xf32>
    %30 = vector.shape_cast %27 : vector<2x10xf32> to vector<1x2x10xf32>
    tpu.vector_store %arg6[%c1_22, %c0_23, %c0_24], %30 {strides = array<i32>} : memref<2x2x10xf32, #tpu.memory_space<vmem>>, vector<1x2x10xf32>,
    return
  }
  func.func @transform_0(%arg0: i32) -> (i32, i32) {
    %c0_i32 = arith.constant 0 : i32
    %c0_i32_0 = arith.constant 0 : i32
    %c0_i32_1 = arith.constant 0 : i32
    return %c0_i32, %c0_i32_0 : i32, i32
  }
  func.func @transform_1(%arg0: i32) -> (i32, i32) {
    %c0_i32 = arith.constant 0 : i32
    %c0_i32_0 = arith.constant 0 : i32
    return %c0_i32, %arg0 : i32, i32
  }
  func.func @transform_2(%arg0: i32) -> (i32, i32) {
    %c0_i32 = arith.constant 0 : i32
    %c0_i32_0 = arith.constant 0 : i32
    return %c0_i32, %arg0 : i32, i32
  }
  func.func @transform_3(%arg0: i32) -> (i32, i32, i32) {
    %c0_i32 = arith.constant 0 : i32
    %c0_i32_0 = arith.constant 0 : i32
    %c0_i32_1 = arith.constant 0 : i32
    return %arg0, %c0_i32, %c0_i32_0 : i32, i32, i32
  }
  func.func @transform_4(%arg0: i32) -> (i32, i32, i32) {
    %c0_i32 = arith.constant 0 : i32
    %c0_i32_0 = arith.constant 0 : i32
    %c0_i32_1 = arith.constant 0 : i32
    return %arg0, %c0_i32, %c0_i32_0 : i32, i32, i32
  }
  func.func @transform_5(%arg0: i32) -> (i32, i32, i32) {
    %c0_i32 = arith.constant 0 : i32
    %c0_i32_0 = arith.constant 0 : i32
    %c0_i32_1 = arith.constant 0 : i32
    return %arg0, %c0_i32, %c0_i32_0 : i32, i32, i32
  }
}

</mosaic_0001>

<llo_original>
// kernel: tpu_custom_call.1
$region0: #{tpu_custom_call.1}
  #allocation0 [shape = 'u32[]', space=smem, size = 0x4, offset = 0x4, fixed_abs, tag = 'smem constant byte address 0x4 - core index']
  #allocation1 [shape = 'u32[72,128]{1,0:T(1,128)}', space=vmem, size = 0x9000, scoped, tag = 'internal scratch']
  %s0 = inlined_call_operand.vmem [shape: bf16[2,1024], index: 0, kind: input, shape index: {}]
  %s1 = inlined_call_operand.hbm [shape: bf16[1024,512], index: 1, kind: input, shape index: {}]
  %s2 = inlined_call_operand.vmem [shape: f32[1,512], index: 2, kind: input, shape index: {}]
  %s3 = inlined_call_operand.vmem [shape: bf16[4,128,10], index: 3, kind: input, shape index: {}]
  %s4 = inlined_call_operand.vmem [shape: f32[4,1,10], index: 4, kind: input, shape index: {}]
  %s5 = inlined_call_operand.hbm [shape: f32[4,2,10], index: 5, kind: output, shape index: {}]
  %s6 = sld [smem:[#allocation0]]
  $region57: #{tpu_custom_call.1} parent=0
    _
  %s8 = ssub.s32 1, %s6
  %s9 = scalar_select 0, %s8, %s6
  $region1: #{tpu_custom_call.1} parent=0
    #allocation2 [shape = 'u8[1048576]{0}', space=vmem, size = 0x100000, scoped, tag = 'input window, operand 1']
    #allocation3 [shape = 's32[2]{0}', space=sflag, size = 0x8, scoped, tag = 'scoped memory for tpu_custom_call.1']
    #allocation4 [shape = 's32[2]{0}', space=sflag, size = 0x8, scoped, tag = 'scoped memory for tpu_custom_call.1']
    #allocation5 [shape = 'u8[4096]{0}', space=vmem, size = 0x1000, scoped, tag = 'output window, operand 0']
    %10 = vsyncpa [#allocation3], 0
    %s11 = scalar_lea.sflag [#allocation3], 1
    %12 = vsyncpa %s11, 0
    %13 = vsyncpa [#allocation4], 0
    %s14 = scalar_lea.sflag [#allocation4], 1
    %15 = vsyncpa %s14, 0
    loop: start=0, step=1, limit=4
    $region2: #{tpu_custom_call.1} parent=1 // loop_pre_header
      _
    $region3: #{tpu_custom_call.1} parent=1 // loop_header
      %s17 = sphi 0, %s21
      %p18 = scmp.ge.s32.totalorder %s17, 4
      %s25 = sphi 0, %s25
      %s27 = sphi 0, %s25
      %s28 = sphi 0, %s27
      %s42 = sphi 0, %s28
      %s48 = sphi 0, %s50
      %s51 = sphi 0, %s48
      %s52 = sphi 0, %s51
      %s68 = sphi 0, %s52
      %s74 = sphi 0, %s76
      %s77 = sphi 0, %s74
      %s78 = sphi 0, %s77
      %s94 = sphi 0, %s78
      %s100 = sphi 0, %s102
      %s103 = sphi 0, %s100
      %s104 = sphi 0, %s103
      %s120 = sphi 0, %s104
      %s126 = sphi 0, %s128
      %s129 = sphi 0, %s126
      %s130 = sphi 0, %s129
      %s146 = sphi 0, %s130
      %s152 = sphi 0, %s154
      %s155 = sphi 0, %s152
      %s156 = sphi 0, %s155
      %s172 = sphi 0, %s156
    $region4: #{tpu_custom_call.1} parent=1 // loop_header_branch
      %20 = sbr.rel (%p18) target = $region8
    $region5: #{tpu_custom_call.1} parent=1 // loop_body
      %s22 = ssub.s32 %s17, 1
      %s23 = ssub.s32 %s17, 2
      %s24 = sadd.s32 %s17, 1
      %s26 = sadd.s32 %s25, 1
      %p29 = scmp.eq.s32.totalorder %s17, 1
      %p30 = scmp.ne.s32.totalorder %s25, %s27
      %p31 = scmp.eq.s32.totalorder %s17, 0
      %p32 = por %p30, %p31
      %p33 = scmp.ne.s32.totalorder %s25, %s27
      %p34 = scmp.eq.s32.totalorder %s22, 1
      %p35 = por %p33, %p34
      %p36 = scmp.ne.s32.totalorder %s27, %s28
      %p37 = scmp.eq.s32.totalorder %s22, 0
      %p38 = por %p36, %p37
      %p39 = scmp.ne.s32.totalorder %s27, %s28
      %p40 = scmp.eq.s32.totalorder %s23, 1
      %p41 = por %p39, %p40
      %p43 = scmp.ne.s32.totalorder %s28, %s42
      %p44 = scmp.eq.s32.totalorder %s23, 0
      %p45 = por %p43, %p44
      %s46 = ssub.s32 %s17, %s24
      %p47 = scmp.eq.s32.totalorder %s46, 0
      %s49 = sadd.s32 %s48, 1
      %s50 = scalar_select %p47, %s48, %s49
      %p53 = pneg %p47
      %p54 = scmp.eq.s32.totalorder %s17, 1
      %p55 = por %p53, %p54
      %p56 = scmp.ne.s32.totalorder %s48, %s51
      %p57 = scmp.eq.s32.totalorder %s17, 0
      %p58 = por %p56, %p57
      %p59 = scmp.ne.s32.totalorder %s48, %s51
      %p60 = scmp.eq.s32.totalorder %s22, 1
      %p61 = por %p59, %p60
      %p62 = scmp.ne.s32.totalorder %s51, %s52
      %p63 = scmp.eq.s32.totalorder %s22, 0
      %p64 = por %p62, %p63
      %p65 = scmp.ne.s32.totalorder %s51, %s52
      %p66 = scmp.eq.s32.totalorder %s23, 1
      %p67 = por %p65, %p66
      %p69 = scmp.ne.s32.totalorder %s52, %s68
      %p70 = scmp.eq.s32.totalorder %s23, 0
      %p71 = por %p69, %p70
      %s72 = ssub.s32 %s17, %s24
      %p73 = scmp.eq.s32.totalorder %s72, 0
      %s75 = sadd.s32 %s74, 1
      %s76 = scalar_select %p73, %s74, %s75
      %p79 = pneg %p73
      %p80 = scmp.eq.s32.totalorder %s17, 1
      %p81 = por %p79, %p80
      %p82 = scmp.ne.s32.totalorder %s74, %s77
      %p83 = scmp.eq.s32.totalorder %s17, 0
      %p84 = por %p82, %p83
      %p85 = scmp.ne.s32.totalorder %s74, %s77
      %p86 = scmp.eq.s32.totalorder %s22, 1
      %p87 = por %p85, %p86
      %p88 = scmp.ne.s32.totalorder %s77, %s78
      %p89 = scmp.eq.s32.totalorder %s22, 0
      %p90 = por %p88, %p89
      %p91 = scmp.ne.s32.totalorder %s77, %s78
      %p92 = scmp.eq.s32.totalorder %s23, 1
      %p93 = por %p91, %p92
      %p95 = scmp.ne.s32.totalorder %s78, %s94
      %p96 = scmp.eq.s32.totalorder %s23, 0
      %p97 = por %p95, %p96
      %s98 = ssub.s32 %s17, %s24
      %p99 = scmp.eq.s32.totalorder %s98, 0
      %s101 = sadd.s32 %s100, 1
      %s102 = scalar_select %p99, %s100, %s101
      %p105 = pneg %p99
      %p106 = scmp.eq.s32.totalorder %s17, 1
      %p107 = por %p105, %p106
      %p108 = scmp.ne.s32.totalorder %s100, %s103
      %p109 = scmp.eq.s32.totalorder %s17, 0
      %p110 = por %p108, %p109
      %p111 = scmp.ne.s32.totalorder %s100, %s103
      %p112 = scmp.eq.s32.totalorder %s22, 1
      %p113 = por %p111, %p112
      %p114 = scmp.ne.s32.totalorder %s103, %s104
      %p115 = scmp.eq.s32.totalorder %s22, 0
      %p116 = por %p114, %p115
      %p117 = scmp.ne.s32.totalorder %s103, %s104
      %p118 = scmp.eq.s32.totalorder %s23, 1
      %p119 = por %p117, %p118
      %p121 = scmp.ne.s32.totalorder %s104, %s120
      %p122 = scmp.eq.s32.totalorder %s23, 0
      %p123 = por %p121, %p122
      %s124 = ssub.s32 %s17, %s24
      %p125 = scmp.eq.s32.totalorder %s124, 0
      %s127 = sadd.s32 %s126, 1
      %s128 = scalar_select %p125, %s126, %s127
      %p131 = pneg %p125
      %p132 = scmp.eq.s32.totalorder %s17, 1
      %p133 = por %p131, %p132
      %p134 = scmp.ne.s32.totalorder %s126, %s129
      %p135 = scmp.eq.s32.totalorder %s17, 0
      %p136 = por %p134, %p135
      %p137 = scmp.ne.s32.totalorder %s126, %s129
      %p138 = scmp.eq.s32.totalorder %s22, 1
      %p139 = por %p137, %p138
      %p140 = scmp.ne.s32.totalorder %s129, %s130
      %p141 = scmp.eq.s32.totalorder %s22, 0
      %p142 = por %p140, %p141
      %p143 = scmp.ne.s32.totalorder %s129, %s130
      %p144 = scmp.eq.s32.totalorder %s23, 1
      %p145 = por %p143, %p144
      %p147 = scmp.ne.s32.totalorder %s130, %s146
      %p148 = scmp.eq.s32.totalorder %s23, 0
      %p149 = por %p147, %p148
      %s150 = ssub.s32 %s17, %s24
      %p151 = scmp.eq.s32.totalorder %s150, 0
      %s153 = sadd.s32 %s152, 1
      %s154 = scalar_select %p151, %s152, %s153
      %p157 = pneg %p151
      %p158 = scmp.eq.s32.totalorder %s17, 1
      %p159 = por %p157, %p158
      %p160 = scmp.ne.s32.totalorder %s152, %s155
      %p161 = scmp.eq.s32.totalorder %s17, 0
      %p162 = por %p160, %p161
      %p163 = scmp.ne.s32.totalorder %s152, %s155
      %p164 = scmp.eq.s32.totalorder %s22, 1
      %p165 = por %p163, %p164
      %p166 = scmp.ne.s32.totalorder %s155, %s156
      %p167 = scmp.eq.s32.totalorder %s22, 0
      %p168 = por %p166, %p167
      %p169 = scmp.ne.s32.totalorder %s155, %s156
      %p170 = scmp.eq.s32.totalorder %s23, 1
      %p171 = por %p169, %p170
      %p173 = scmp.ne.s32.totalorder %s156, %s172
      %p174 = scmp.eq.s32.totalorder %s23, 0
      %p175 = por %p173, %p174
      %p176 = scmp.le.s32.totalorder 1, %s17
      %p177 = scmp.lt.s32.totalorder %s17, 3
      %p178 = pnand %p176, %p177
      %p179 = pneg %p178
      // Predicated region
      $region9: #{tpu_custom_call.1} parent=5 // pred_check
        _
      $region10: #{tpu_custom_call.1} parent=5 // pred_check_branch
        %181 = sbr.rel (%p178) target = $region12
      $region11: #{tpu_custom_call.1} parent=5 // pred_region
        %s182 = ssub.s32 %s17, 1
        // Predicated region
        $region13: #{tpu_custom_call.1} parent=11 // pred_check
          %p183 = pneg %p38
        $region14: #{tpu_custom_call.1} parent=11 // pred_check_branch
          %185 = sbr.rel (%p183) target = $region16
        $region15: #{tpu_custom_call.1} parent=11 // pred_region
          _
        $region16: #{tpu_custom_call.1} parent=11 // pred_fallthru
          _
      $region12: #{tpu_custom_call.1} parent=5 // pred_fallthru
        _
      %p186 = scmp.lt.s32.totalorder %s17, 2
      // Predicated region
      $region17: #{tpu_custom_call.1} parent=5 // pred_check
        %p187 = pneg %p186
      $region18: #{tpu_custom_call.1} parent=5 // pred_check_branch
        %189 = sbr.rel (%p187) target = $region20
      $region19: #{tpu_custom_call.1} parent=5 // pred_region
        // Predicated region
        $region21: #{tpu_custom_call.1} parent=19 // pred_check
          %p190 = pneg %p58
        $region22: #{tpu_custom_call.1} parent=19 // pred_check_branch
          %192 = sbr.rel (%p190) target = $region24
        $region23: #{tpu_custom_call.1} parent=19 // pred_region
          %s193 = sand.u32 %s48, 1
          %s194 = scalar_lea.sflag [#allocation3], %s193
          %s195 = sand.u32 %s48, 1
          %s196 = smul.addr %s195, 1024
          %s197 = scalar_lea.vmem [#allocation2], %s196
          %s198 = smul.u32 2, %s17
          %200 = vsyncadd %s194, 0
          %s201 = smul.addr %s198, 4
          %s202 = scalar_lea.hbm %s1, %s201
          %s203 = sshll.u32 %s202, 4
          %s204 = int_to_ptr.hbm [resolvable:$true] %s203
          %s205 = sshll.u32 %s197, 4
          %s206 = int_to_ptr.vmem [resolvable:$true] %s205
          %211 = dma.hbm_to_vmem [thread:$0]  %s204, 16384, %s206, %s194, 256, 128, 8
        $region24: #{tpu_custom_call.1} parent=19 // pred_fallthru
          _
        // Predicated region
        $region25: #{tpu_custom_call.1} parent=19 // pred_check
          %p212 = pneg %p84
        $region26: #{tpu_custom_call.1} parent=19 // pred_check_branch
          %214 = sbr.rel (%p212) target = $region28
        $region27: #{tpu_custom_call.1} parent=19 // pred_region
          %s215 = smul.u32 2, %s17
          %p216 = scmp.lt.s32.totalorder %s215, 3
          %s217 = scalar_select %p216, %s215, 3
          %s218 = scalar_lea.vmem %s2, %s217
          %s219 = smul.u32 2, %s17
        $region28: #{tpu_custom_call.1} parent=19 // pred_fallthru
          _
        // Predicated region
        $region29: #{tpu_custom_call.1} parent=19 // pred_check
          %p220 = pneg %p110
        $region30: #{tpu_custom_call.1} parent=19 // pred_check_branch
          %222 = sbr.rel (%p220) target = $region32
        $region31: #{tpu_custom_call.1} parent=19 // pred_region
          %s223 = smul.u32 2, %s17
          %p224 = scmp.lt.s32.totalorder %s223, 3
          %s225 = scalar_select %p224, %s223, 3
          %s226 = smul.addr %s225, 16
          %s227 = smul.addr %s226, 4
          %s228 = scalar_lea.vmem %s3, %s227
          %s229 = smul.u32 2, %s17
        $region32: #{tpu_custom_call.1} parent=19 // pred_fallthru
          _
        // Predicated region
        $region33: #{tpu_custom_call.1} parent=19 // pred_check
          %p230 = pneg %p136
        $region34: #{tpu_custom_call.1} parent=19 // pred_check_branch
          %232 = sbr.rel (%p230) target = $region36
        $region35: #{tpu_custom_call.1} parent=19 // pred_region
          %s233 = smul.u32 2, %s17
          %p234 = scmp.lt.s32.totalorder %s233, 3
          %s235 = scalar_select %p234, %s233, 3
          %s236 = scalar_lea.vmem %s4, %s235
          %s237 = smul.u32 2, %s17
        $region36: #{tpu_custom_call.1} parent=19 // pred_fallthru
          _
      $region20: #{tpu_custom_call.1} parent=5 // pred_fallthru
        _
      %p238 = scmp.le.s32.totalorder 1, %s17
      %p239 = scmp.lt.s32.totalorder %s17, 3
      %p240 = pnand %p238, %p239
      %p241 = pneg %p240
      // Predicated region
      $region37: #{tpu_custom_call.1} parent=5 // pred_check
        _
      $region38: #{tpu_custom_call.1} parent=5 // pred_check_branch
        %243 = sbr.rel (%p240) target = $region40
      $region39: #{tpu_custom_call.1} parent=5 // pred_region
        %s244 = ssub.s32 %s17, 1
        %s245 = sand.u32 %s51, 1
        %s246 = scalar_lea.sflag [#allocation3], %s245
        %s247 = sand.u32 %s51, 1
        %s248 = smul.addr %s247, 1024
        %s249 = scalar_lea.vmem [#allocation2], %s248
        // Predicated region
        $region41: #{tpu_custom_call.1} parent=39 // pred_check
          %p250 = pneg %p64
        $region42: #{tpu_custom_call.1} parent=39 // pred_check_branch
          %252 = sbr.rel (%p250) target = $region44
        $region43: #{tpu_custom_call.1} parent=39 // pred_region
          %254 = dma.done %s246, 16384
        $region44: #{tpu_custom_call.1} parent=39 // pred_fallthru
          _
        %p255 = pneg %p38
        %p256 = pneg %p35
        %s257 = sand.u32 %s51, 1
        %s258 = scalar_lea.sflag [#allocation3], %s257
        %s259 = sand.u32 %s51, 1
        %s260 = smul.addr %s259, 1024
        %s261 = scalar_lea.vmem [#allocation2], %s260
        %p262 = pneg %p64
        %p263 = pneg %p61
        %s264 = smul.u32 2, %s22
        %p265 = scmp.lt.s32.totalorder %s264, 3
        %s266 = scalar_select %p265, %s264, 3
        %s267 = scalar_lea.vmem %s2, %s266
        %p268 = pneg %p90
        %p269 = pneg %p87
        %s270 = smul.u32 2, %s22
        %p271 = scmp.lt.s32.totalorder %s270, 3
        %s272 = scalar_select %p271, %s270, 3
        %s273 = smul.addr %s272, 16
        %s274 = smul.addr %s273, 4
        %s275 = scalar_lea.vmem %s3, %s274
        %p276 = pneg %p116
        %p277 = pneg %p113
        %s278 = smul.u32 2, %s22
        %p279 = scmp.lt.s32.totalorder %s278, 3
        %s280 = scalar_select %p279, %s278, 3
        %s281 = scalar_lea.vmem %s4, %s280
        %p282 = pneg %p142
        %p283 = pneg %p139
        %p284 = pneg %p168
        %p285 = pneg %p165
        %s286 = sand.u32 %s155, 1
        %s287 = scalar_lea.sflag [#allocation4], %s286
        %s288 = sand.u32 %s155, 1
        %s289 = smul.addr %s288, 4
        %s290 = scalar_lea.vmem [#allocation5], %s289
        %s291 = smul.u32 2, %s22
        %s292 = smul.u32 2, %s22
        %p293 = scmp.lt.s32.totalorder %s292, 3
        %s294 = scalar_select %p293, %s292, 3
        %s295 = scalar_lea.vmem %s2, %s294
        %s296 = smul.u32 2, %s22
        %s297 = smul.u32 2, %s22
        %p298 = scmp.lt.s32.totalorder %s297, 3
        %s299 = scalar_select %p298, %s297, 3
        %s300 = smul.addr %s299, 16
        %s301 = smul.addr %s300, 4
        %s302 = scalar_lea.vmem %s3, %s301
        %s303 = smul.u32 2, %s22
        %s304 = smul.u32 2, %s22
        %p305 = scmp.lt.s32.totalorder %s304, 3
        %s306 = scalar_select %p305, %s304, 3
        %s307 = scalar_lea.vmem %s4, %s306
        %s308 = smul.u32 2, %s22
        %s309 = smul.u32 2, %s22
        %v310 = vld [vmem:[%s0] sm:$0xff]
        %v311 = vld [vmem:[%s249] sm:$0xff]
        %v312 = vld [vmem:[%s249 + $0x8] sm:$0xff]
        %v313 = vld [vmem:[%s249 + $0x10] sm:$0xff]
        %v314 = vld [vmem:[%s249 + $0x18] sm:$0xff]
        %v315 = vld [vmem:[%s249 + $0x20] sm:$0xff]
        %v316 = vld [vmem:[%s249 + $0x28] sm:$0xff]
        %v317 = vld [vmem:[%s249 + $0x30] sm:$0xff]
        %v318 = vld [vmem:[%s249 + $0x38] sm:$0xff]
        %v319 = vld [vmem:[%s249 + $0x40] sm:$0xff]
        %v320 = vld [vmem:[%s249 + $0x48] sm:$0xff]
        %v321 = vld [vmem:[%s249 + $0x50] sm:$0xff]
        %v322 = vld [vmem:[%s249 + $0x58] sm:$0xff]
        %v323 = vld [vmem:[%s249 + $0x60] sm:$0xff]
        %v324 = vld [vmem:[%s249 + $0x68] sm:$0xff]
        %v325 = vld [vmem:[%s249 + $0x70] sm:$0xff]
        %v326 = vld [vmem:[%s249 + $0x78] sm:$0xff]
        %v327 = vld [vmem:[%s249 + $0x80] sm:$0xff]
        %v328 = vld [vmem:[%s249 + $0x88] sm:$0xff]
        %v329 = vld [vmem:[%s249 + $0x90] sm:$0xff]
        %v330 = vld [vmem:[%s249 + $0x98] sm:$0xff]
        %v331 = vld [vmem:[%s249 + $0xa0] sm:$0xff]
        %v332 = vld [vmem:[%s249 + $0xa8] sm:$0xff]
        %v333 = vld [vmem:[%s249 + $0xb0] sm:$0xff]
        %v334 = vld [vmem:[%s249 + $0xb8] sm:$0xff]
        %v335 = vld [vmem:[%s249 + $0xc0] sm:$0xff]
        %v336 = vld [vmem:[%s249 + $0xc8] sm:$0xff]
        %v337 = vld [vmem:[%s249 + $0xd0] sm:$0xff]
        %v338 = vld [vmem:[%s249 + $0xd8] sm:$0xff]
        %v339 = vld [vmem:[%s249 + $0xe0] sm:$0xff]
        %v340 = vld [vmem:[%s249 + $0xe8] sm:$0xff]
        %v341 = vld [vmem:[%s249 + $0xf0] sm:$0xff]
        %v342 = vld [vmem:[%s249 + $0xf8] sm:$0xff]
        %v343 = vld [vmem:[%s249 + $0x100] sm:$0xff]
        %v344 = vld [vmem:[%s249 + $0x108] sm:$0xff]
        %v345 = vld [vmem:[%s249 + $0x110] sm:$0xff]
        %v346 = vld [vmem:[%s249 + $0x118] sm:$0xff]
        %v347 = vld [vmem:[%s249 + $0x120] sm:$0xff]
        %v348 = vld [vmem:[%s249 + $0x128] sm:$0xff]
        %v349 = vld [vmem:[%s249 + $0x130] sm:$0xff]
        %v350 = vld [vmem:[%s249 + $0x138] sm:$0xff]
        %v351 = vld [vmem:[%s249 + $0x140] sm:$0xff]
        %v352 = vld [vmem:[%s249 + $0x148] sm:$0xff]
        %v353 = vld [vmem:[%s249 + $0x150] sm:$0xff]
        %v354 = vld [vmem:[%s249 + $0x158] sm:$0xff]
        %v355 = vld [vmem:[%s249 + $0x160] sm:$0xff]
        %v356 = vld [vmem:[%s249 + $0x168] sm:$0xff]
        %v357 = vld [vmem:[%s249 + $0x170] sm:$0xff]
        %v358 = vld [vmem:[%s249 + $0x178] sm:$0xff]
        %v359 = vld [vmem:[%s249 + $0x180] sm:$0xff]
        %v360 = vld [vmem:[%s249 + $0x188] sm:$0xff]
        %v361 = vld [vmem:[%s249 + $0x190] sm:$0xff]
        %v362 = vld [vmem:[%s249 + $0x198] sm:$0xff]
        %v363 = vld [vmem:[%s249 + $0x1a0] sm:$0xff]
        %v364 = vld [vmem:[%s249 + $0x1a8] sm:$0xff]
        %v365 = vld [vmem:[%s249 + $0x1b0] sm:$0xff]
        %v366 = vld [vmem:[%s249 + $0x1b8] sm:$0xff]
        %v367 = vld [vmem:[%s249 + $0x1c0] sm:$0xff]
        %v368 = vld [vmem:[%s249 + $0x1c8] sm:$0xff]
        %v369 = vld [vmem:[%s249 + $0x1d0] sm:$0xff]
        %v370 = vld [vmem:[%s249 + $0x1d8] sm:$0xff]
        %v371 = vld [vmem:[%s249 + $0x1e0] sm:$0xff]
        %v372 = vld [vmem:[%s249 + $0x1e8] sm:$0xff]
        %v373 = vld [vmem:[%s249 + $0x1f0] sm:$0xff]
        %v374 = vld [vmem:[%s249 + $0x1f8] sm:$0xff]
        %v375 = vld [vmem:[%s249 + $0x200] sm:$0xff]
        %v376 = vld [vmem:[%s249 + $0x208] sm:$0xff]
        %v377 = vld [vmem:[%s249 + $0x210] sm:$0xff]
        %v378 = vld [vmem:[%s249 + $0x218] sm:$0xff]
        %v379 = vld [vmem:[%s249 + $0x220] sm:$0xff]
        %v380 = vld [vmem:[%s249 + $0x228] sm:$0xff]
        %v381 = vld [vmem:[%s249 + $0x230] sm:$0xff]
        %v382 = vld [vmem:[%s249 + $0x238] sm:$0xff]
        %v383 = vld [vmem:[%s249 + $0x240] sm:$0xff]
        %v384 = vld [vmem:[%s249 + $0x248] sm:$0xff]
        %v385 = vld [vmem:[%s249 + $0x250] sm:$0xff]
        %v386 = vld [vmem:[%s249 + $0x258] sm:$0xff]
        %v387 = vld [vmem:[%s249 + $0x260] sm:$0xff]
        %v388 = vld [vmem:[%s249 + $0x268] sm:$0xff]
        %v389 = vld [vmem:[%s249 + $0x270] sm:$0xff]
        %v390 = vld [vmem:[%s249 + $0x278] sm:$0xff]
        %v391 = vld [vmem:[%s249 + $0x280] sm:$0xff]
        %v392 = vld [vmem:[%s249 + $0x288] sm:$0xff]
        %v393 = vld [vmem:[%s249 + $0x290] sm:$0xff]
        %v394 = vld [vmem:[%s249 + $0x298] sm:$0xff]
        %v395 = vld [vmem:[%s249 + $0x2a0] sm:$0xff]
        %v396 = vld [vmem:[%s249 + $0x2a8] sm:$0xff]
        %v397 = vld [vmem:[%s249 + $0x2b0] sm:$0xff]
        %v398 = vld [vmem:[%s249 + $0x2b8] sm:$0xff]
        %v399 = vld [vmem:[%s249 + $0x2c0] sm:$0xff]
        %v400 = vld [vmem:[%s249 + $0x2c8] sm:$0xff]
        %v401 = vld [vmem:[%s249 + $0x2d0] sm:$0xff]
        %v402 = vld [vmem:[%s249 + $0x2d8] sm:$0xff]
        %v403 = vld [vmem:[%s249 + $0x2e0] sm:$0xff]
        %v404 = vld [vmem:[%s249 + $0x2e8] sm:$0xff]
        %v405 = vld [vmem:[%s249 + $0x2f0] sm:$0xff]
        %v406 = vld [vmem:[%s249 + $0x2f8] sm:$0xff]
        %v407 = vld [vmem:[%s249 + $0x300] sm:$0xff]
        %v408 = vld [vmem:[%s249 + $0x308] sm:$0xff]
        %v409 = vld [vmem:[%s249 + $0x310] sm:$0xff]
        %v410 = vld [vmem:[%s249 + $0x318] sm:$0xff]
        %v411 = vld [vmem:[%s249 + $0x320] sm:$0xff]
        %v412 = vld [vmem:[%s249 + $0x328] sm:$0xff]
        %v413 = vld [vmem:[%s249 + $0x330] sm:$0xff]
        %v414 = vld [vmem:[%s249 + $0x338] sm:$0xff]
        %v415 = vld [vmem:[%s249 + $0x340] sm:$0xff]
        %v416 = vld [vmem:[%s249 + $0x348] sm:$0xff]
        %v417 = vld [vmem:[%s249 + $0x350] sm:$0xff]
        %v418 = vld [vmem:[%s249 + $0x358] sm:$0xff]
        %v419 = vld [vmem:[%s249 + $0x360] sm:$0xff]
        %v420 = vld [vmem:[%s249 + $0x368] sm:$0xff]
        %v421 = vld [vmem:[%s249 + $0x370] sm:$0xff]
        %v422 = vld [vmem:[%s249 + $0x378] sm:$0xff]
        %v423 = vld [vmem:[%s249 + $0x380] sm:$0xff]
        %v424 = vld [vmem:[%s249 + $0x388] sm:$0xff]
        %v425 = vld [vmem:[%s249 + $0x390] sm:$0xff]
        %v426 = vld [vmem:[%s249 + $0x398] sm:$0xff]
        %v427 = vld [vmem:[%s249 + $0x3a0] sm:$0xff]
        %v428 = vld [vmem:[%s249 + $0x3a8] sm:$0xff]
        %v429 = vld [vmem:[%s249 + $0x3b0] sm:$0xff]
        %v430 = vld [vmem:[%s249 + $0x3b8] sm:$0xff]
        %v431 = vld [vmem:[%s249 + $0x3c0] sm:$0xff]
        %v432 = vld [vmem:[%s249 + $0x3c8] sm:$0xff]
        %v433 = vld [vmem:[%s249 + $0x3d0] sm:$0xff]
        %v434 = vld [vmem:[%s249 + $0x3d8] sm:$0xff]
        %v435 = vld [vmem:[%s249 + $0x3e0] sm:$0xff]
        %v436 = vld [vmem:[%s249 + $0x3e8] sm:$0xff]
        %v437 = vld [vmem:[%s249 + $0x3f0] sm:$0xff]
        %v438 = vld [vmem:[%s249 + $0x3f8] sm:$0xff]
        %v439 = vld [vmem:[%s295] sm:$0x3]
        %v441 = vperm.slane %v439, 0
        %v442 = vperm.slane %v439, 1
        %446 = vst [vmem:[#allocation1] ss:$9 sm:$0xff] %v310
        %v447 = vld [vmem:[#allocation1] sm:$0xff]
        %v448 = vld [vmem:[#allocation1 + $0x9] sm:$0xff]
        %v449 = vld [vmem:[#allocation1 + $0x12] sm:$0xff]
        %v450 = vld [vmem:[#allocation1 + $0x1b] sm:$0xff]
        %v451 = vld [vmem:[#allocation1 + $0x24] sm:$0xff]
        %v452 = vld [vmem:[#allocation1 + $0x2d] sm:$0xff]
        %v453 = vld [vmem:[#allocation1 + $0x36] sm:$0xff]
        %v454 = vld [vmem:[#allocation1 + $0x3f] sm:$0xff]
        %v591 = vunpack.c.l.b16 %v311
        %v592 = vunpack.c.h.b16 %v311
        %v593 = vunpack.c.l.b16 %v312
        %v594 = vunpack.c.h.b16 %v312
        %v595 = vunpack.c.l.b16 %v313
        %v596 = vunpack.c.h.b16 %v313
        %v597 = vunpack.c.l.b16 %v314
        %v598 = vunpack.c.h.b16 %v314
        %v599 = vunpack.c.l.b16 %v315
        %v600 = vunpack.c.h.b16 %v315
        %v601 = vunpack.c.l.b16 %v316
        %v602 = vunpack.c.h.b16 %v316
        %v603 = vunpack.c.l.b16 %v317
        %v604 = vunpack.c.h.b16 %v317
        %v605 = vunpack.c.l.b16 %v318
        %v606 = vunpack.c.h.b16 %v318
        %v607 = vunpack.c.l.b16 %v319
        %v608 = vunpack.c.h.b16 %v319
        %v609 = vunpack.c.l.b16 %v320
        %v610 = vunpack.c.h.b16 %v320
        %v611 = vunpack.c.l.b16 %v321
        %v612 = vunpack.c.h.b16 %v321
        %v613 = vunpack.c.l.b16 %v322
        %v614 = vunpack.c.h.b16 %v322
        %v615 = vunpack.c.l.b16 %v323
        %v616 = vunpack.c.h.b16 %v323
        %v617 = vunpack.c.l.b16 %v324
        %v618 = vunpack.c.h.b16 %v324
        %v619 = vunpack.c.l.b16 %v325
        %v620 = vunpack.c.h.b16 %v325
        %v621 = vunpack.c.l.b16 %v326
        %v622 = vunpack.c.h.b16 %v326
        %v623 = vunpack.c.l.b16 %v327
        %v624 = vunpack.c.h.b16 %v327
        %v625 = vunpack.c.l.b16 %v328
        %v626 = vunpack.c.h.b16 %v328
        %v627 = vunpack.c.l.b16 %v329
        %v628 = vunpack.c.h.b16 %v329
        %v629 = vunpack.c.l.b16 %v330
        %v630 = vunpack.c.h.b16 %v330
        %v631 = vunpack.c.l.b16 %v331
        %v632 = vunpack.c.h.b16 %v331
        %v633 = vunpack.c.l.b16 %v332
        %v634 = vunpack.c.h.b16 %v332
        %v635 = vunpack.c.l.b16 %v333
        %v636 = vunpack.c.h.b16 %v333
        %v637 = vunpack.c.l.b16 %v334
        %v638 = vunpack.c.h.b16 %v334
        %v639 = vunpack.c.l.b16 %v335
        %v640 = vunpack.c.h.b16 %v335
        %v641 = vunpack.c.l.b16 %v336
        %v642 = vunpack.c.h.b16 %v336
        %v643 = vunpack.c.l.b16 %v337
        %v644 = vunpack.c.h.b16 %v337
        %v645 = vunpack.c.l.b16 %v338
        %v646 = vunpack.c.h.b16 %v338
        %v647 = vunpack.c.l.b16 %v339
        %v648 = vunpack.c.h.b16 %v339
        %v649 = vunpack.c.l.b16 %v340
        %v650 = vunpack.c.h.b16 %v340
        %v651 = vunpack.c.l.b16 %v341
        %v652 = vunpack.c.h.b16 %v341
        %v653 = vunpack.c.l.b16 %v342
        %v654 = vunpack.c.h.b16 %v342
        %v655 = vunpack.c.l.b16 %v343
        %v656 = vunpack.c.h.b16 %v343
        %v657 = vunpack.c.l.b16 %v344
        %v658 = vunpack.c.h.b16 %v344
        %v659 = vunpack.c.l.b16 %v345
        %v660 = vunpack.c.h.b16 %v345
        %v661 = vunpack.c.l.b16 %v346
        %v662 = vunpack.c.h.b16 %v346
        %v663 = vunpack.c.l.b16 %v347
        %v664 = vunpack.c.h.b16 %v347
        %v665 = vunpack.c.l.b16 %v348
        %v666 = vunpack.c.h.b16 %v348
        %v667 = vunpack.c.l.b16 %v349
        %v668 = vunpack.c.h.b16 %v349
        %v669 = vunpack.c.l.b16 %v350
        %v670 = vunpack.c.h.b16 %v350
        %v671 = vunpack.c.l.b16 %v351
        %v672 = vunpack.c.h.b16 %v351
        %v673 = vunpack.c.l.b16 %v352
        %v674 = vunpack.c.h.b16 %v352
        %v675 = vunpack.c.l.b16 %v353
        %v676 = vunpack.c.h.b16 %v353
        %v677 = vunpack.c.l.b16 %v354
        %v678 = vunpack.c.h.b16 %v354
        %v679 = vunpack.c.l.b16 %v355
        %v680 = vunpack.c.h.b16 %v355
        %v681 = vunpack.c.l.b16 %v356
        %v682 = vunpack.c.h.b16 %v356
        %v683 = vunpack.c.l.b16 %v357
        %v684 = vunpack.c.h.b16 %v357
        %v685 = vunpack.c.l.b16 %v358
        %v686 = vunpack.c.h.b16 %v358
        %v687 = vunpack.c.l.b16 %v359
        %v688 = vunpack.c.h.b16 %v359
        %v689 = vunpack.c.l.b16 %v360
        %v690 = vunpack.c.h.b16 %v360
        %v691 = vunpack.c.l.b16 %v361
        %v692 = vunpack.c.h.b16 %v361
        %v693 = vunpack.c.l.b16 %v362
        %v694 = vunpack.c.h.b16 %v362
        %v695 = vunpack.c.l.b16 %v363
        %v696 = vunpack.c.h.b16 %v363
        %v697 = vunpack.c.l.b16 %v364
        %v698 = vunpack.c.h.b16 %v364
        %v699 = vunpack.c.l.b16 %v365
        %v700 = vunpack.c.h.b16 %v365
        %v701 = vunpack.c.l.b16 %v366
        %v702 = vunpack.c.h.b16 %v366
        %v703 = vunpack.c.l.b16 %v367
        %v704 = vunpack.c.h.b16 %v367
        %v705 = vunpack.c.l.b16 %v368
        %v706 = vunpack.c.h.b16 %v368
        %v707 = vunpack.c.l.b16 %v369
        %v708 = vunpack.c.h.b16 %v369
        %v709 = vunpack.c.l.b16 %v370
        %v710 = vunpack.c.h.b16 %v370
        %v711 = vunpack.c.l.b16 %v371
        %v712 = vunpack.c.h.b16 %v371
        %v713 = vunpack.c.l.b16 %v372
        %v714 = vunpack.c.h.b16 %v372
        %v715 = vunpack.c.l.b16 %v373
        %v716 = vunpack.c.h.b16 %v373
        %v717 = vunpack.c.l.b16 %v374
        %v718 = vunpack.c.h.b16 %v374
        %v719 = vunpack.c.l.b16 %v375
        %v720 = vunpack.c.h.b16 %v375
        %v721 = vunpack.c.l.b16 %v376
        %v722 = vunpack.c.h.b16 %v376
        %v723 = vunpack.c.l.b16 %v377
        %v724 = vunpack.c.h.b16 %v377
        %v725 = vunpack.c.l.b16 %v378
        %v726 = vunpack.c.h.b16 %v378
        %v727 = vunpack.c.l.b16 %v379
        %v728 = vunpack.c.h.b16 %v379
        %v729 = vunpack.c.l.b16 %v380
        %v730 = vunpack.c.h.b16 %v380
        %v731 = vunpack.c.l.b16 %v381
        %v732 = vunpack.c.h.b16 %v381
        %v733 = vunpack.c.l.b16 %v382
        %v734 = vunpack.c.h.b16 %v382
        %v735 = vunpack.c.l.b16 %v383
        %v736 = vunpack.c.h.b16 %v383
        %v737 = vunpack.c.l.b16 %v384
        %v738 = vunpack.c.h.b16 %v384
        %v739 = vunpack.c.l.b16 %v385
        %v740 = vunpack.c.h.b16 %v385
        %v741 = vunpack.c.l.b16 %v386
        %v742 = vunpack.c.h.b16 %v386
        %v743 = vunpack.c.l.b16 %v387
        %v744 = vunpack.c.h.b16 %v387
        %v745 = vunpack.c.l.b16 %v388
        %v746 = vunpack.c.h.b16 %v388
        %v747 = vunpack.c.l.b16 %v389
        %v748 = vunpack.c.h.b16 %v389
        %v749 = vunpack.c.l.b16 %v390
        %v750 = vunpack.c.h.b16 %v390
        %v751 = vunpack.c.l.b16 %v391
        %v752 = vunpack.c.h.b16 %v391
        %v753 = vunpack.c.l.b16 %v392
        %v754 = vunpack.c.h.b16 %v392
        %v755 = vunpack.c.l.b16 %v393
        %v756 = vunpack.c.h.b16 %v393
        %v757 = vunpack.c.l.b16 %v394
        %v758 = vunpack.c.h.b16 %v394
        %v759 = vunpack.c.l.b16 %v395
        %v760 = vunpack.c.h.b16 %v395
        %v761 = vunpack.c.l.b16 %v396
        %v762 = vunpack.c.h.b16 %v396
        %v763 = vunpack.c.l.b16 %v397
        %v764 = vunpack.c.h.b16 %v397
        %v765 = vunpack.c.l.b16 %v398
        %v766 = vunpack.c.h.b16 %v398
        %v767 = vunpack.c.l.b16 %v399
        %v768 = vunpack.c.h.b16 %v399
        %v769 = vunpack.c.l.b16 %v400
        %v770 = vunpack.c.h.b16 %v400
        %v771 = vunpack.c.l.b16 %v401
        %v772 = vunpack.c.h.b16 %v401
        %v773 = vunpack.c.l.b16 %v402
        %v774 = vunpack.c.h.b16 %v402
        %v775 = vunpack.c.l.b16 %v403
        %v776 = vunpack.c.h.b16 %v403
        %v777 = vunpack.c.l.b16 %v404
        %v778 = vunpack.c.h.b16 %v404
        %v779 = vunpack.c.l.b16 %v405
        %v780 = vunpack.c.h.b16 %v405
        %v781 = vunpack.c.l.b16 %v406
        %v782 = vunpack.c.h.b16 %v406
        %v783 = vunpack.c.l.b16 %v407
        %v784 = vunpack.c.h.b16 %v407
        %v785 = vunpack.c.l.b16 %v408
        %v786 = vunpack.c.h.b16 %v408
        %v787 = vunpack.c.l.b16 %v409
        %v788 = vunpack.c.h.b16 %v409
        %v789 = vunpack.c.l.b16 %v410
        %v790 = vunpack.c.h.b16 %v410
        %v791 = vunpack.c.l.b16 %v411
        %v792 = vunpack.c.h.b16 %v411
        %v793 = vunpack.c.l.b16 %v412
        %v794 = vunpack.c.h.b16 %v412
        %v795 = vunpack.c.l.b16 %v413
        %v796 = vunpack.c.h.b16 %v413
        %v797 = vunpack.c.l.b16 %v414
        %v798 = vunpack.c.h.b16 %v414
        %v799 = vunpack.c.l.b16 %v415
        %v800 = vunpack.c.h.b16 %v415
        %v801 = vunpack.c.l.b16 %v416
        %v802 = vunpack.c.h.b16 %v416
        %v803 = vunpack.c.l.b16 %v417
        %v804 = vunpack.c.h.b16 %v417
        %v805 = vunpack.c.l.b16 %v418
        %v806 = vunpack.c.h.b16 %v418
        %v807 = vunpack.c.l.b16 %v419
        %v808 = vunpack.c.h.b16 %v419
        %v809 = vunpack.c.l.b16 %v420
        %v810 = vunpack.c.h.b16 %v420
        %v811 = vunpack.c.l.b16 %v421
        %v812 = vunpack.c.h.b16 %v421
        %v813 = vunpack.c.l.b16 %v422
        %v814 = vunpack.c.h.b16 %v422
        %v815 = vunpack.c.l.b16 %v423
        %v816 = vunpack.c.h.b16 %v423
        %v817 = vunpack.c.l.b16 %v424
        %v818 = vunpack.c.h.b16 %v424
        %v819 = vunpack.c.l.b16 %v425
        %v820 = vunpack.c.h.b16 %v425
        %v821 = vunpack.c.l.b16 %v426
        %v822 = vunpack.c.h.b16 %v426
        %v823 = vunpack.c.l.b16 %v427
        %v824 = vunpack.c.h.b16 %v427
        %v825 = vunpack.c.l.b16 %v428
        %v826 = vunpack.c.h.b16 %v428
        %v827 = vunpack.c.l.b16 %v429
        %v828 = vunpack.c.h.b16 %v429
        %v829 = vunpack.c.l.b16 %v430
        %v830 = vunpack.c.h.b16 %v430
        %v831 = vunpack.c.l.b16 %v431
        %v832 = vunpack.c.h.b16 %v431
        %v833 = vunpack.c.l.b16 %v432
        %v834 = vunpack.c.h.b16 %v432
        %v835 = vunpack.c.l.b16 %v433
        %v836 = vunpack.c.h.b16 %v433
        %v837 = vunpack.c.l.b16 %v434
        %v838 = vunpack.c.h.b16 %v434
        %v839 = vunpack.c.l.b16 %v435
        %v840 = vunpack.c.h.b16 %v435
        %v841 = vunpack.c.l.b16 %v436
        %v842 = vunpack.c.h.b16 %v436
        %v843 = vunpack.c.l.b16 %v437
        %v844 = vunpack.c.h.b16 %v437
        %v845 = vunpack.c.l.b16 %v438
        %v846 = vunpack.c.h.b16 %v438
        %v847 = vpack.c.b16 %v593, %v591
        %v848 = vpack.c.b16 %v594, %v592
        %v849 = vpack.c.b16 %v597, %v595
        %v850 = vpack.c.b16 %v598, %v596
        %v851 = vpack.c.b16 %v601, %v599
        %v852 = vpack.c.b16 %v602, %v600
        %v853 = vpack.c.b16 %v605, %v603
        %v854 = vpack.c.b16 %v606, %v604
        %v855 = vpack.c.b16 %v609, %v607
        %v856 = vpack.c.b16 %v610, %v608
        %v857 = vpack.c.b16 %v613, %v611
        %v858 = vpack.c.b16 %v614, %v612
        %v859 = vpack.c.b16 %v617, %v615
        %v860 = vpack.c.b16 %v618, %v616
        %v861 = vpack.c.b16 %v621, %v619
        %v862 = vpack.c.b16 %v622, %v620
        %v863 = vpack.c.b16 %v625, %v623
        %v864 = vpack.c.b16 %v626, %v624
        %v865 = vpack.c.b16 %v629, %v627
        %v866 = vpack.c.b16 %v630, %v628
        %v867 = vpack.c.b16 %v633, %v631
        %v868 = vpack.c.b16 %v634, %v632
        %v869 = vpack.c.b16 %v637, %v635
        %v870 = vpack.c.b16 %v638, %v636
        %v871 = vpack.c.b16 %v641, %v639
        %v872 = vpack.c.b16 %v642, %v640
        %v873 = vpack.c.b16 %v645, %v643
        %v874 = vpack.c.b16 %v646, %v644
        %v875 = vpack.c.b16 %v649, %v647
        %v876 = vpack.c.b16 %v650, %v648
        %v877 = vpack.c.b16 %v653, %v651
        %v878 = vpack.c.b16 %v654, %v652
        %v879 = vpack.c.b16 %v657, %v655
        %v880 = vpack.c.b16 %v658, %v656
        %v881 = vpack.c.b16 %v661, %v659
        %v882 = vpack.c.b16 %v662, %v660
        %v883 = vpack.c.b16 %v665, %v663
        %v884 = vpack.c.b16 %v666, %v664
        %v885 = vpack.c.b16 %v669, %v667
        %v886 = vpack.c.b16 %v670, %v668
        %v887 = vpack.c.b16 %v673, %v671
        %v888 = vpack.c.b16 %v674, %v672
        %v889 = vpack.c.b16 %v677, %v675
        %v890 = vpack.c.b16 %v678, %v676
        %v891 = vpack.c.b16 %v681, %v679
        %v892 = vpack.c.b16 %v682, %v680
        %v893 = vpack.c.b16 %v685, %v683
        %v894 = vpack.c.b16 %v686, %v684
        %v895 = vpack.c.b16 %v689, %v687
        %v896 = vpack.c.b16 %v690, %v688
        %v897 = vpack.c.b16 %v693, %v691
        %v898 = vpack.c.b16 %v694, %v692
        %v899 = vpack.c.b16 %v697, %v695
        %v900 = vpack.c.b16 %v698, %v696
        %v901 = vpack.c.b16 %v701, %v699
        %v902 = vpack.c.b16 %v702, %v700
        %v903 = vpack.c.b16 %v705, %v703
        %v904 = vpack.c.b16 %v706, %v704
        %v905 = vpack.c.b16 %v709, %v707
        %v906 = vpack.c.b16 %v710, %v708
        %v907 = vpack.c.b16 %v713, %v711
        %v908 = vpack.c.b16 %v714, %v712
        %v909 = vpack.c.b16 %v717, %v715
        %v910 = vpack.c.b16 %v718, %v716
        %v911 = vpack.c.b16 %v721, %v719
        %v912 = vpack.c.b16 %v722, %v720
        %v913 = vpack.c.b16 %v725, %v723
        %v914 = vpack.c.b16 %v726, %v724
        %v915 = vpack.c.b16 %v729, %v727
        %v916 = vpack.c.b16 %v730, %v728
        %v917 = vpack.c.b16 %v733, %v731
        %v918 = vpack.c.b16 %v734, %v732
        %v919 = vpack.c.b16 %v737, %v735
        %v920 = vpack.c.b16 %v738, %v736
        %v921 = vpack.c.b16 %v741, %v739
        %v922 = vpack.c.b16 %v742, %v740
        %v923 = vpack.c.b16 %v745, %v743
        %v924 = vpack.c.b16 %v746, %v744
        %v925 = vpack.c.b16 %v749, %v747
        %v926 = vpack.c.b16 %v750, %v748
        %v927 = vpack.c.b16 %v753, %v751
        %v928 = vpack.c.b16 %v754, %v752
        %v929 = vpack.c.b16 %v757, %v755
        %v930 = vpack.c.b16 %v758, %v756
        %v931 = vpack.c.b16 %v761, %v759
        %v932 = vpack.c.b16 %v762, %v760
        %v933 = vpack.c.b16 %v765, %v763
        %v934 = vpack.c.b16 %v766, %v764
        %v935 = vpack.c.b16 %v769, %v767
        %v936 = vpack.c.b16 %v770, %v768
        %v937 = vpack.c.b16 %v773, %v771
        %v938 = vpack.c.b16 %v774, %v772
        %v939 = vpack.c.b16 %v777, %v775
        %v940 = vpack.c.b16 %v778, %v776
        %v941 = vpack.c.b16 %v781, %v779
        %v942 = vpack.c.b16 %v782, %v780
        %v943 = vpack.c.b16 %v785, %v783
        %v944 = vpack.c.b16 %v786, %v784
        %v945 = vpack.c.b16 %v789, %v787
        %v946 = vpack.c.b16 %v790, %v788
        %v947 = vpack.c.b16 %v793, %v791
        %v948 = vpack.c.b16 %v794, %v792
        %v949 = vpack.c.b16 %v797, %v795
        %v950 = vpack.c.b16 %v798, %v796
        %v951 = vpack.c.b16 %v801, %v799
        %v952 = vpack.c.b16 %v802, %v800
        %v953 = vpack.c.b16 %v805, %v803
        %v954 = vpack.c.b16 %v806, %v804
        %v955 = vpack.c.b16 %v809, %v807
        %v956 = vpack.c.b16 %v810, %v808
        %v957 = vpack.c.b16 %v813, %v811
        %v958 = vpack.c.b16 %v814, %v812
        %v959 = vpack.c.b16 %v817, %v815
        %v960 = vpack.c.b16 %v818, %v816
        %v961 = vpack.c.b16 %v821, %v819
        %v962 = vpack.c.b16 %v822, %v820
        %v963 = vpack.c.b16 %v825, %v823
        %v964 = vpack.c.b16 %v826, %v824
        %v965 = vpack.c.b16 %v829, %v827
        %v966 = vpack.c.b16 %v830, %v828
        %v967 = vpack.c.b16 %v833, %v831
        %v968 = vpack.c.b16 %v834, %v832
        %v969 = vpack.c.b16 %v837, %v835
        %v970 = vpack.c.b16 %v838, %v836
        %v971 = vpack.c.b16 %v841, %v839
        %v972 = vpack.c.b16 %v842, %v840
        %v973 = vpack.c.b16 %v845, %v843
        %v974 = vpack.c.b16 %v846, %v844
        %1103 = vmatpush.bf16.msra.mxu0 %v861
        %1104 = vmatpush.bf16.msra.mxu0 %v859
        %1105 = vmatpush.bf16.msra.mxu0 %v857
        %1106 = vmatpush.bf16.msra.mxu0 %v855
        %1107 = vmatpush.bf16.msra.mxu0 %v853
        %1108 = vmatpush.bf16.msra.mxu0 %v851
        %1109 = vmatpush.bf16.msra.mxu0 %v849
        %1110 = vmatpush.bf16.msra.mxu0 %v847
        %1111 = vmatmul.bf16.gmra.mxu0 %v447
        %v1112 = vpop.f32.mrf.mxu0
        %v1113 = vadd.f32 %v441, %v1112
        %v1114 = vpop.f32.mrf.mxu0
        %1115 = vdwg.mxu0
        %1116 = vmatpush.bf16.msra.mxu0 %v877
        %1117 = vmatpush.bf16.msra.mxu0 %v875
        %1118 = vmatpush.bf16.msra.mxu0 %v873
        %1119 = vmatpush.bf16.msra.mxu0 %v871
        %1120 = vmatpush.bf16.msra.mxu0 %v869
        %1121 = vmatpush.bf16.msra.mxu0 %v867
        %1122 = vmatpush.bf16.msra.mxu0 %v865
        %1123 = vmatpush.bf16.msra.mxu0 %v863
        %1124 = vmatmul.bf16.gmra.mxu0 %v448
        %v1125 = vpop.f32.mrf.mxu0
        %v1126 = vadd.f32 %v1113, %v1125
        %v1127 = vpop.f32.mrf.mxu0
        %1128 = vdwg.mxu0
        %1129 = vmatpush.bf16.msra.mxu0 %v893
        %1130 = vmatpush.bf16.msra.mxu0 %v891
        %1131 = vmatpush.bf16.msra.mxu0 %v889
        %1132 = vmatpush.bf16.msra.mxu0 %v887
        %1133 = vmatpush.bf16.msra.mxu0 %v885
        %1134 = vmatpush.bf16.msra.mxu0 %v883
        %1135 = vmatpush.bf16.msra.mxu0 %v881
        %1136 = vmatpush.bf16.msra.mxu0 %v879
        %1137 = vmatmul.bf16.gmra.mxu0 %v449
        %v1138 = vpop.f32.mrf.mxu0
        %v1139 = vadd.f32 %v1126, %v1138
        %v1140 = vpop.f32.mrf.mxu0
        %1141 = vdwg.mxu0
        %1142 = vmatpush.bf16.msra.mxu0 %v909
        %1143 = vmatpush.bf16.msra.mxu0 %v907
        %1144 = vmatpush.bf16.msra.mxu0 %v905
        %1145 = vmatpush.bf16.msra.mxu0 %v903
        %1146 = vmatpush.bf16.msra.mxu0 %v901
        %1147 = vmatpush.bf16.msra.mxu0 %v899
        %1148 = vmatpush.bf16.msra.mxu0 %v897
        %1149 = vmatpush.bf16.msra.mxu0 %v895
        %1150 = vmatmul.bf16.gmra.mxu0 %v450
        %v1151 = vpop.f32.mrf.mxu0
        %v1152 = vadd.f32 %v1139, %v1151
        %v1153 = vpop.f32.mrf.mxu0
        %1154 = vdwg.mxu0
        %1155 = vmatpush.bf16.msra.mxu0 %v925
        %1156 = vmatpush.bf16.msra.mxu0 %v923
        %1157 = vmatpush.bf16.msra.mxu0 %v921
        %1158 = vmatpush.bf16.msra.mxu0 %v919
        %1159 = vmatpush.bf16.msra.mxu0 %v917
        %1160 = vmatpush.bf16.msra.mxu0 %v915
        %1161 = vmatpush.bf16.msra.mxu0 %v913
        %1162 = vmatpush.bf16.msra.mxu0 %v911
        %1163 = vmatmul.bf16.gmra.mxu0 %v451
        %v1164 = vpop.f32.mrf.mxu0
        %v1165 = vadd.f32 %v1152, %v1164
        %v1166 = vpop.f32.mrf.mxu0
        %1167 = vdwg.mxu0
        %1168 = vmatpush.bf16.msra.mxu0 %v941
        %1169 = vmatpush.bf16.msra.mxu0 %v939
        %1170 = vmatpush.bf16.msra.mxu0 %v937
        %1171 = vmatpush.bf16.msra.mxu0 %v935
        %1172 = vmatpush.bf16.msra.mxu0 %v933
        %1173 = vmatpush.bf16.msra.mxu0 %v931
        %1174 = vmatpush.bf16.msra.mxu0 %v929
        %1175 = vmatpush.bf16.msra.mxu0 %v927
        %1176 = vmatmul.bf16.gmra.mxu0 %v452
        %v1177 = vpop.f32.mrf.mxu0
        %v1178 = vadd.f32 %v1165, %v1177
        %v1179 = vpop.f32.mrf.mxu0
        %1180 = vdwg.mxu0
        %1181 = vmatpush.bf16.msra.mxu0 %v957
        %1182 = vmatpush.bf16.msra.mxu0 %v955
        %1183 = vmatpush.bf16.msra.mxu0 %v953
        %1184 = vmatpush.bf16.msra.mxu0 %v951
        %1185 = vmatpush.bf16.msra.mxu0 %v949
        %1186 = vmatpush.bf16.msra.mxu0 %v947
        %1187 = vmatpush.bf16.msra.mxu0 %v945
        %1188 = vmatpush.bf16.msra.mxu0 %v943
        %1189 = vmatmul.bf16.gmra.mxu0 %v453
        %v1190 = vpop.f32.mrf.mxu0
        %v1191 = vadd.f32 %v1178, %v1190
        %v1192 = vpop.f32.mrf.mxu0
        %1193 = vdwg.mxu0
        %1194 = vmatpush.bf16.msra.mxu0 %v973
        %1195 = vmatpush.bf16.msra.mxu0 %v971
        %1196 = vmatpush.bf16.msra.mxu0 %v969
        %1197 = vmatpush.bf16.msra.mxu0 %v967
        %1198 = vmatpush.bf16.msra.mxu0 %v965
        %1199 = vmatpush.bf16.msra.mxu0 %v963
        %1200 = vmatpush.bf16.msra.mxu0 %v961
        %1201 = vmatpush.bf16.msra.mxu0 %v959
        %1202 = vmatmul.bf16.gmra.mxu0 %v454
        %v1203 = vpop.f32.mrf.mxu0
        %v1204 = vadd.f32 %v1191, %v1203
        %v1205 = vpop.f32.mrf.mxu0
        %1206 = vdwg.mxu0
        %1207 = vmatpush.bf16.msra.mxu0 %v862
        %1208 = vmatpush.bf16.msra.mxu0 %v860
        %1209 = vmatpush.bf16.msra.mxu0 %v858
        %1210 = vmatpush.bf16.msra.mxu0 %v856
        %1211 = vmatpush.bf16.msra.mxu0 %v854
        %1212 = vmatpush.bf16.msra.mxu0 %v852
        %1213 = vmatpush.bf16.msra.mxu0 %v850
        %1214 = vmatpush.bf16.msra.mxu0 %v848
        %1215 = vmatmul.bf16.gmra.mxu0 %v447
        %v1216 = vpop.f32.mrf.mxu0
        %v1217 = vadd.f32 %v442, %v1216
        %v1218 = vpop.f32.mrf.mxu0
        %1219 = vdwg.mxu0
        %1220 = vmatpush.bf16.msra.mxu0 %v878
        %1221 = vmatpush.bf16.msra.mxu0 %v876
        %1222 = vmatpush.bf16.msra.mxu0 %v874
        %1223 = vmatpush.bf16.msra.mxu0 %v872
        %1224 = vmatpush.bf16.msra.mxu0 %v870
        %1225 = vmatpush.bf16.msra.mxu0 %v868
        %1226 = vmatpush.bf16.msra.mxu0 %v866
        %1227 = vmatpush.bf16.msra.mxu0 %v864
        %1228 = vmatmul.bf16.gmra.mxu0 %v448
        %v1229 = vpop.f32.mrf.mxu0
        %v1230 = vadd.f32 %v1217, %v1229
        %v1231 = vpop.f32.mrf.mxu0
        %1232 = vdwg.mxu0
        %1233 = vmatpush.bf16.msra.mxu0 %v894
        %1234 = vmatpush.bf16.msra.mxu0 %v892
        %1235 = vmatpush.bf16.msra.mxu0 %v890
        %1236 = vmatpush.bf16.msra.mxu0 %v888
        %1237 = vmatpush.bf16.msra.mxu0 %v886
        %1238 = vmatpush.bf16.msra.mxu0 %v884
        %1239 = vmatpush.bf16.msra.mxu0 %v882
        %1240 = vmatpush.bf16.msra.mxu0 %v880
        %1241 = vmatmul.bf16.gmra.mxu0 %v449
        %v1242 = vpop.f32.mrf.mxu0
        %v1243 = vadd.f32 %v1230, %v1242
        %v1244 = vpop.f32.mrf.mxu0
        %1245 = vdwg.mxu0
        %1246 = vmatpush.bf16.msra.mxu0 %v910
        %1247 = vmatpush.bf16.msra.mxu0 %v908
        %1248 = vmatpush.bf16.msra.mxu0 %v906
        %1249 = vmatpush.bf16.msra.mxu0 %v904
        %1250 = vmatpush.bf16.msra.mxu0 %v902
        %1251 = vmatpush.bf16.msra.mxu0 %v900
        %1252 = vmatpush.bf16.msra.mxu0 %v898
        %1253 = vmatpush.bf16.msra.mxu0 %v896
        %1254 = vmatmul.bf16.gmra.mxu0 %v450
        %v1255 = vpop.f32.mrf.mxu0
        %v1256 = vadd.f32 %v1243, %v1255
        %v1257 = vpop.f32.mrf.mxu0
        %1258 = vdwg.mxu0
        %1259 = vmatpush.bf16.msra.mxu0 %v926
        %1260 = vmatpush.bf16.msra.mxu0 %v924
        %1261 = vmatpush.bf16.msra.mxu0 %v922
        %1262 = vmatpush.bf16.msra.mxu0 %v920
        %1263 = vmatpush.bf16.msra.mxu0 %v918
        %1264 = vmatpush.bf16.msra.mxu0 %v916
        %1265 = vmatpush.bf16.msra.mxu0 %v914
        %1266 = vmatpush.bf16.msra.mxu0 %v912
        %1267 = vmatmul.bf16.gmra.mxu0 %v451
        %v1268 = vpop.f32.mrf.mxu0
        %v1269 = vadd.f32 %v1256, %v1268
        %v1270 = vpop.f32.mrf.mxu0
        %1271 = vdwg.mxu0
        %1272 = vmatpush.bf16.msra.mxu0 %v942
        %1273 = vmatpush.bf16.msra.mxu0 %v940
        %1274 = vmatpush.bf16.msra.mxu0 %v938
        %1275 = vmatpush.bf16.msra.mxu0 %v936
        %1276 = vmatpush.bf16.msra.mxu0 %v934
        %1277 = vmatpush.bf16.msra.mxu0 %v932
        %1278 = vmatpush.bf16.msra.mxu0 %v930
        %1279 = vmatpush.bf16.msra.mxu0 %v928
        %1280 = vmatmul.bf16.gmra.mxu0 %v452
        %v1281 = vpop.f32.mrf.mxu0
        %v1282 = vadd.f32 %v1269, %v1281
        %v1283 = vpop.f32.mrf.mxu0
        %1284 = vdwg.mxu0
        %1285 = vmatpush.bf16.msra.mxu0 %v958
        %1286 = vmatpush.bf16.msra.mxu0 %v956
        %1287 = vmatpush.bf16.msra.mxu0 %v954
        %1288 = vmatpush.bf16.msra.mxu0 %v952
        %1289 = vmatpush.bf16.msra.mxu0 %v950
        %1290 = vmatpush.bf16.msra.mxu0 %v948
        %1291 = vmatpush.bf16.msra.mxu0 %v946
        %1292 = vmatpush.bf16.msra.mxu0 %v944
        %1293 = vmatmul.bf16.gmra.mxu0 %v453
        %v1294 = vpop.f32.mrf.mxu0
        %v1295 = vadd.f32 %v1282, %v1294
        %v1296 = vpop.f32.mrf.mxu0
        %1297 = vdwg.mxu0
        %1298 = vmatpush.bf16.msra.mxu0 %v974
        %1299 = vmatpush.bf16.msra.mxu0 %v972
        %1300 = vmatpush.bf16.msra.mxu0 %v970
        %1301 = vmatpush.bf16.msra.mxu0 %v968
        %1302 = vmatpush.bf16.msra.mxu0 %v966
        %1303 = vmatpush.bf16.msra.mxu0 %v964
        %1304 = vmatpush.bf16.msra.mxu0 %v962
        %1305 = vmatpush.bf16.msra.mxu0 %v960
        %1306 = vmatmul.bf16.gmra.mxu0 %v454
        %v1307 = vpop.f32.mrf.mxu0
        %v1308 = vadd.f32 %v1295, %v1307
        %v1309 = vpop.f32.mrf.mxu0
        %1310 = vdwg.mxu0
        %v1311 = vmax.f32 %v1204, 0.0
        %v1312 = vmax.f32 %v1308, 0.0
        %v1313 = vpack.c.bf16 %v1312, %v1311
        %v1314 = vld [vmem:[%s302] sm:$0xf]
        %v1315 = vld [vmem:[%s302 + $0x4] sm:$0xf]
        %v1316 = vld [vmem:[%s302 + $0x8] sm:$0xf]
        %v1317 = vld [vmem:[%s302 + $0xc] sm:$0xf]
        %v1318 = vld [vmem:[%s302 + $0x10] sm:$0xf]
        %v1319 = vld [vmem:[%s302 + $0x14] sm:$0xf]
        %v1320 = vld [vmem:[%s302 + $0x18] sm:$0xf]
        %v1321 = vld [vmem:[%s302 + $0x1c] sm:$0xf]
        %v1322 = vld [vmem:[%s302 + $0x20] sm:$0xf]
        %v1323 = vld [vmem:[%s302 + $0x24] sm:$0xf]
        %v1324 = vld [vmem:[%s302 + $0x28] sm:$0xf]
        %v1325 = vld [vmem:[%s302 + $0x2c] sm:$0xf]
        %v1326 = vld [vmem:[%s302 + $0x30] sm:$0xf]
        %v1327 = vld [vmem:[%s302 + $0x34] sm:$0xf]
        %v1328 = vld [vmem:[%s302 + $0x38] sm:$0xf]
        %v1329 = vld [vmem:[%s302 + $0x3c] sm:$0xf]
        %v1330 = vld [vmem:[%s307] sm:$0x1]
        %v1332 = vperm.slane %v1330, 0
        %v1350 = vunpack.c.l.b16 %v1314
        %v1351 = vunpack.c.l.b16 %v1315
        %v1352 = vunpack.c.l.b16 %v1316
        %v1353 = vunpack.c.l.b16 %v1317
        %v1354 = vunpack.c.l.b16 %v1318
        %v1355 = vunpack.c.l.b16 %v1319
        %v1356 = vunpack.c.l.b16 %v1320
        %v1357 = vunpack.c.l.b16 %v1321
        %v1358 = vunpack.c.l.b16 %v1322
        %v1359 = vunpack.c.l.b16 %v1323
        %v1360 = vunpack.c.l.b16 %v1324
        %v1361 = vunpack.c.l.b16 %v1325
        %v1362 = vunpack.c.l.b16 %v1326
        %v1363 = vunpack.c.l.b16 %v1327
        %v1364 = vunpack.c.l.b16 %v1328
        %v1365 = vunpack.c.l.b16 %v1329
        %v1366 = vpack.c.b16 %v1351, %v1350
        %v1367 = vpack.c.b16 %v1353, %v1352
        %v1368 = vpack.c.b16 %v1355, %v1354
        %v1369 = vpack.c.b16 %v1357, %v1356
        %v1370 = vpack.c.b16 %v1359, %v1358
        %v1371 = vpack.c.b16 %v1361, %v1360
        %v1372 = vpack.c.b16 %v1363, %v1362
        %v1373 = vpack.c.b16 %v1365, %v1364
        %1382 = vmatpush.bf16.msra.mxu0 %v1373
        %1383 = vmatpush.bf16.msra.mxu0 %v1372
        %1384 = vmatpush.bf16.msra.mxu0 %v1371
        %1385 = vmatpush.bf16.msra.mxu0 %v1370
        %1386 = vmatpush.bf16.msra.mxu0 %v1369
        %1387 = vmatpush.bf16.msra.mxu0 %v1368
        %1388 = vmatpush.bf16.msra.mxu0 %v1367
        %1389 = vmatpush.bf16.msra.mxu0 %v1366
        %1390 = vmatmul.bf16.gmra.mxu0 %v1313
        %v1391 = vpop.f32.mrf.mxu0
        %v1392 = vadd.f32 %v1332, %v1391
        %v1393 = vpop.f32.mrf.mxu0
        %1394 = vdwg.mxu0
        %vm1395 = vcmask 74752
        %1396 = vst.msk [vmem:[%s290] sm:$0x3] %vm1395, %v1392
        %s1397 = scalar_lea.vmem %s302, 64
        %v1398 = vld [vmem:[%s1397] sm:$0xf]
        %v1399 = vld [vmem:[%s1397 + $0x4] sm:$0xf]
        %v1400 = vld [vmem:[%s1397 + $0x8] sm:$0xf]
        %v1401 = vld [vmem:[%s1397 + $0xc] sm:$0xf]
        %v1402 = vld [vmem:[%s1397 + $0x10] sm:$0xf]
        %v1403 = vld [vmem:[%s1397 + $0x14] sm:$0xf]
        %v1404 = vld [vmem:[%s1397 + $0x18] sm:$0xf]
        %v1405 = vld [vmem:[%s1397 + $0x1c] sm:$0xf]
        %v1406 = vld [vmem:[%s1397 + $0x20] sm:$0xf]
        %v1407 = vld [vmem:[%s1397 + $0x24] sm:$0xf]
        %v1408 = vld [vmem:[%s1397 + $0x28] sm:$0xf]
        %v1409 = vld [vmem:[%s1397 + $0x2c] sm:$0xf]
        %v1410 = vld [vmem:[%s1397 + $0x30] sm:$0xf]
        %v1411 = vld [vmem:[%s1397 + $0x34] sm:$0xf]
        %v1412 = vld [vmem:[%s1397 + $0x38] sm:$0xf]
        %v1413 = vld [vmem:[%s1397 + $0x3c] sm:$0xf]
        %s1414 = scalar_lea.vmem %s307, 1
        %v1415 = vld [vmem:[%s1414] sm:$0x1]
        %v1417 = vperm.slane %v1415, 0
        %v1420 = vunpack.c.h.b16 %v1313
        %v1421 = vpack.c.b16 %v1420, %v1420
        %v1439 = vunpack.c.l.b16 %v1398
        %v1440 = vunpack.c.l.b16 %v1399
        %v1441 = vunpack.c.l.b16 %v1400
        %v1442 = vunpack.c.l.b16 %v1401
        %v1443 = vunpack.c.l.b16 %v1402
        %v1444 = vunpack.c.l.b16 %v1403
        %v1445 = vunpack.c.l.b16 %v1404
        %v1446 = vunpack.c.l.b16 %v1405
        %v1447 = vunpack.c.l.b16 %v1406
        %v1448 = vunpack.c.l.b16 %v1407
        %v1449 = vunpack.c.l.b16 %v1408
        %v1450 = vunpack.c.l.b16 %v1409
        %v1451 = vunpack.c.l.b16 %v1410
        %v1452 = vunpack.c.l.b16 %v1411
        %v1453 = vunpack.c.l.b16 %v1412
        %v1454 = vunpack.c.l.b16 %v1413
        %v1455 = vpack.c.b16 %v1440, %v1439
        %v1456 = vpack.c.b16 %v1442, %v1441
        %v1457 = vpack.c.b16 %v1444, %v1443
        %v1458 = vpack.c.b16 %v1446, %v1445
        %v1459 = vpack.c.b16 %v1448, %v1447
        %v1460 = vpack.c.b16 %v1450, %v1449
        %v1461 = vpack.c.b16 %v1452, %v1451
        %v1462 = vpack.c.b16 %v1454, %v1453
        %1471 = vmatpush.bf16.msra.mxu0 %v1462
        %1472 = vmatpush.bf16.msra.mxu0 %v1461
        %1473 = vmatpush.bf16.msra.mxu0 %v1460
        %1474 = vmatpush.bf16.msra.mxu0 %v1459
        %1475 = vmatpush.bf16.msra.mxu0 %v1458
        %1476 = vmatpush.bf16.msra.mxu0 %v1457
        %1477 = vmatpush.bf16.msra.mxu0 %v1456
        %1478 = vmatpush.bf16.msra.mxu0 %v1455
        %1479 = vmatmul.bf16.gmra.mxu0 %v1421
        %v1480 = vpop.f32.mrf.mxu0
        %v1481 = vadd.f32 %v1417, %v1480
        %v1482 = vpop.f32.mrf.mxu0
        %1483 = vdwg.mxu0
        %s1484 = scalar_lea.vmem %s290, 2 [#allocation5]
        %1485 = vst.msk [vmem:[%s1484] sm:$0x3] %vm1395, %v1481
        %s1486 = sand.u32 %s155, 1
        %s1487 = scalar_lea.sflag [#allocation4], %s1486
        %s1488 = sand.u32 %s155, 1
        %s1489 = smul.addr %s1488, 4
        %s1490 = scalar_lea.vmem [#allocation5], %s1489
        // Predicated region
        $region45: #{tpu_custom_call.1} parent=39 // pred_check
          %p1491 = pneg %p165
        $region46: #{tpu_custom_call.1} parent=39 // pred_check_branch
          %1493 = sbr.rel (%p1491) target = $region48
        $region47: #{tpu_custom_call.1} parent=39 // pred_region
          %s1494 = smul.u32 2, %s22
          %1496 = vsyncadd %s1487, 0
          %s1497 = smul.addr %s1494, 2
          %s1498 = scalar_lea.hbm %s5, %s1497
          %s1499 = sshll.u32 %s1490, 4
          %s1500 = int_to_ptr.vmem [resolvable:$true] %s1499
          %s1501 = sshll.u32 %s1498, 4
          %s1502 = int_to_ptr.hbm [resolvable:$true] %s1501
          %1507 = dma.vmem_to_hbm [thread:$0]  %s1500, 64, %s1502, %s1487, 32, 32, 2
        $region48: #{tpu_custom_call.1} parent=39 // pred_fallthru
          _
      $region40: #{tpu_custom_call.1} parent=5 // pred_fallthru
        _
      %p1508 = scmp.le.s32.totalorder 2, %s17
      // Predicated region
      $region49: #{tpu_custom_call.1} parent=5 // pred_check
        %p1509 = pneg %p1508
      $region50: #{tpu_custom_call.1} parent=5 // pred_check_branch
        %1511 = sbr.rel (%p1509) target = $region52
      $region51: #{tpu_custom_call.1} parent=5 // pred_region
        %s1512 = ssub.s32 %s17, 2
        // Predicated region
        $region53: #{tpu_custom_call.1} parent=51 // pred_check
          %p1513 = pneg %p171
        $region54: #{tpu_custom_call.1} parent=51 // pred_check_branch
          %1515 = sbr.rel (%p1513) target = $region56
        $region55: #{tpu_custom_call.1} parent=51 // pred_region
          %s1516 = sand.u32 %s156, 1
          %s1517 = scalar_lea.sflag [#allocation4], %s1516
          %s1518 = sand.u32 %s156, 1
          %s1519 = smul.addr %s1518, 4
          %s1520 = scalar_lea.vmem [#allocation5], %s1519
          %1522 = dma.done %s1517, 64
        $region56: #{tpu_custom_call.1} parent=51 // pred_fallthru
          _
      $region52: #{tpu_custom_call.1} parent=5 // pred_fallthru
        _
    $region6: #{tpu_custom_call.1} parent=1 // loop_footer
      %s21 = sadd.s32 1, %s17
    $region7: #{tpu_custom_call.1} parent=1 // loop_footer_branch
      %16 = sbr.rel target = $region3
    $region8: #{tpu_custom_call.1} parent=1 // loop_exit
      _
    %1523 = vsyncpa [#allocation3], 1
    %s1524 = scalar_lea.sflag [#allocation3], 1
    %1525 = vsyncpa %s1524, 1
    %1526 = vsyncpa [#allocation4], 1
    %s1527 = scalar_lea.sflag [#allocation4], 1
    %1528 = vsyncpa %s1527, 1

</llo_original>
